<compile_context>
chip_gen: v7x
topology: tpu7x:2x2x1
jax: 0.10.0
libtpu: 0.0.40
codegen_flags: <defaults>
</compile_context>

<pallas_src>
import jax
import jax.numpy as jnp
from jax.experimental import pallas as pl
from jax.experimental.pallas import tpu as pltpu


def _round_up(x, m):
    return (x + m - 1) // m * m


def _pick_tile(dim, target, align):
    """Largest multiple of `align` that divides round_up(dim, align) and is <= target."""
    dp = _round_up(dim, align)
    if dp <= target:
        return dp
    q = dp // align
    limit = max(1, target // align)
    best = 1
    for d in range(1, limit + 1):
        if q % d == 0:
            best = d
    return align * best


def float16_module_kernel(x_ref, w_ref, b_ref, o_ref):
    k = pl.program_id(2)

    # --- stage 2: wrapped module forward in bf16 (module.bfloat16()) ---
    # bf16 x bf16 matmul on the MXU; f32 partials accumulate directly in the
    # resident output block (its block index (i, j) is constant across k).
    partial = jnp.dot(x_ref[...], w_ref[...], preferred_element_type=jnp.float32)

    @pl.when(k == 0)
    def _():
        o_ref[...] = partial

    @pl.when(k > 0)
    def _():
        o_ref[...] += partial

    @pl.when(k == pl.num_programs(2) - 1)
    def _():
        # Epilogue: bias add once, module's bf16 output dtype, then
        # --- stage 3: float16_to_fp32 on the output ---
        y = o_ref[...] + b_ref[...].astype(jnp.float32)
        o_ref[...] = y.astype(jnp.bfloat16).astype(jnp.float32)


def float16_module_forward(x_fp32, w_bf16, b_bf16, *, tm=512, tn=512, tk=1024):
    """Float16Module.forward with a bf16 dense wrapped module.

    x_fp32 : (B, S, H) float32
    w_bf16 : (H, N)    bfloat16   (module weight, already .bfloat16()'d)
    b_bf16 : (N,)      bfloat16   (module bias)
    returns (B, S, N)  float32
    """
    B, S, H = x_fp32.shape
    N = w_bf16.shape[1]
    M = B * S

    # Tile sizes: divisors of the rounded-up dims -> no wasted zero-padding
    # beyond the minimum needed for (16,128)/(8,128) tiling alignment.
    tm = _pick_tile(M, tm, 16)     # bf16 activations pack 16 rows/sublane
    tn = _pick_tile(N, tn, 128)    # lane-dense output stores
    tk = _pick_tile(H, tk, 128)    # lane-aligned reduction tiles

    Mp = _round_up(M, tm)
    Np = _round_up(N, tn)
    Kp = _round_up(H, tk)

    # Keep both v7x TensorCores busy if the parallel grid collapsed to 1x1.
    if (Mp // tm) * (Np // tn) == 1 and tn % 256 == 0:
        tn //= 2

    # --- stage 1: fp32_to_float16 once in the wrapper, fused with the pad ---
    x2 = x_fp32.reshape(M, H).astype(jnp.bfloat16)
    if (Mp, Kp) != (M, H):
        x2 = jnp.pad(x2, ((0, Mp - M), (0, Kp - H)))
    w2 = w_bf16
    if (Kp, Np) != (H, N):
        w2 = jnp.pad(w2, ((0, Kp - H), (0, Np - N)))
    b2 = b_bf16.reshape(1, N)
    if Np != N:
        b2 = jnp.pad(b2, ((0, 0), (0, Np - N)))

    grid = (Mp // tm, Np // tn, Kp // tk)

    # Double-buffered footprint: 2*(x + w + out) tiles; comfortably under the
    # explicit limit below on all of v5e / v6e / v7x.
    vmem_limit_bytes = 48 * 1024 * 1024

    out = pl.pallas_call(
        float16_module_kernel,
        out_shape=jax.ShapeDtypeStruct((Mp, Np), jnp.float32),
        grid=grid,
        in_specs=[
            pl.BlockSpec((tm, tk), lambda i, j, k: (i, k)),   # activations (bf16)
            pl.BlockSpec((tk, tn), lambda i, j, k: (k, j)),   # weight slab (bf16)
            pl.BlockSpec((1, tn), lambda i, j, k: (0, j)),    # bias slab   (bf16)
        ],
        out_specs=pl.BlockSpec((tm, tn), lambda i, j, k: (i, j)),
        compiler_params=pltpu.CompilerParams(
            dimension_semantics=("parallel", "parallel", "arbitrary"),
            vmem_limit_bytes=vmem_limit_bytes,
        ),
    )(x2, w2, b2)

    return out[:M, :N].reshape(B, S, N)


def _reference(x_fp32, w_bf16, b_bf16):
    # Pure-JAX reference of Float16Module semantics.
    x_bf16 = x_fp32.astype(jnp.bfloat16)
    y = jnp.dot(x_bf16, w_bf16, preferred_element_type=jnp.float32)
    y = (y + b_bf16.astype(jnp.float32)).astype(jnp.bfloat16)
    return y.astype(jnp.float32)


if __name__ == "__main__":
    key = jax.random.PRNGKey(0)

    # --- small demo shapes consistent with the wrapper ---
    B, S, H, N = 2, 8, 32, 32
    kx, kw, kb, k2 = jax.random.split(key, 4)

    x = jax.random.normal(kx, (B, S, H), dtype=jnp.float32)
    # module.bfloat16(): params created fp32 then cast to bf16.
    w = (jax.random.normal(kw, (H, N), dtype=jnp.float32) * 0.02).astype(jnp.bfloat16)
    b = (jax.random.normal(kb, (N,), dtype=jnp.float32) * 0.02).astype(jnp.bfloat16)

    out = jax.block_until_ready(float16_module_forward(x, w, b))
    ref = _reference(x, w, b)
    assert out.shape == (B, S, N)
    assert out.dtype == jnp.float32
    assert jnp.allclose(out, ref, atol=1e-2, rtol=1e-2)

    # --- a moderately larger case that exercises the M/N/K tiling path ---
    B2, S2, H2, N2 = 2, 256, 1024, 512
    ka, kc, kd = jax.random.split(k2, 3)
    x_l = jax.random.normal(ka, (B2, S2, H2), dtype=jnp.float32)
    w_l = (jax.random.normal(kc, (H2, N2), dtype=jnp.float32) * 0.02).astype(jnp.bfloat16)
    b_l = (jax.random.normal(kd, (N2,), dtype=jnp.float32) * 0.02).astype(jnp.bfloat16)

    out_l = jax.block_until_ready(float16_module_forward(x_l, w_l, b_l))
    ref_l = _reference(x_l, w_l, b_l)
    assert out_l.shape == (B2, S2, N2)
    assert jnp.allclose(out_l, ref_l, atol=1e-2, rtol=1e-2)

    print("KERNEL_OK")
</pallas_src>

<mosaic_0001>
module attributes {stable_mosaic.version = 11 : i64} {
  func.func @float16_module_kernel(%arg0: i32, %arg1: i32, %arg2: i32, %arg3: memref<16x128xbf16, #tpu.memory_space<vmem>>, %arg4: memref<128x128xbf16, #tpu.memory_space<vmem>>, %arg5: memref<1x128xbf16, #tpu.memory_space<vmem>>, %arg6: memref<16x128xf32, #tpu.memory_space<vmem>>) attributes {dimension_semantics = [#tpu.dimension_semantics<parallel>, #tpu.dimension_semantics<parallel>, #tpu.dimension_semantics<arbitrary>], iteration_bounds = array<i64: 1, 1, 1>, scalar_prefetch = 0 : i64, scratch_operands = 0 : i64, tpu.core_type = #tpu.core_type<tc>, window_params = [{transform_indices = @transform_0, window_bounds = array<i64: 16, 128>}, {transform_indices = @transform_1, window_bounds = array<i64: 128, 128>}, {transform_indices = @transform_2, window_bounds = array<i64: 1, 128>}, {transform_indices = @transform_3, window_bounds = array<i64: 16, 128>}]} {
    %c0 = arith.constant 0 : index
    %c0_0 = arith.constant 0 : index
    %0 = vector.load %arg3[%c0, %c0_0] : memref<16x128xbf16, #tpu.memory_space<vmem>>, vector<16x128xbf16>
    %c0_1 = arith.constant 0 : index
    %c0_2 = arith.constant 0 : index
    %1 = vector.load %arg4[%c0_1, %c0_2] : memref<128x128xbf16, #tpu.memory_space<vmem>>, vector<128x128xbf16>
    %cst = arith.constant dense<0.000000e+00> : vector<16x128xf32>
    %2 = tpu.matmul %0, %1, %cst {dimension_numbers = #tpu.dot_dimension_numbers<[1], [0], [0], [1], [0, 0, 1, 1], [], []>} : vector<16x128xbf16>, vector<128x128xbf16>, vector<16x128xf32> -> vector<16x128xf32>
    %c0_i32 = arith.constant 0 : i32
    %3 = arith.cmpi eq, %arg2, %c0_i32 : i32
    %4 = arith.extui %3 : i1 to i32
    %c0_i32_3 = arith.constant 0 : i32
    %5 = arith.cmpi ne, %4, %c0_i32_3 : i32
    scf.if %5 {
      %c0_8 = arith.constant 0 : index
      %c0_9 = arith.constant 0 : index
      %12 = vector.load %arg6[%c0_8, %c0_9] : memref<16x128xf32, #tpu.memory_space<vmem>>, vector<16x128xf32>
      tpu.vector_store %arg6[%c0_8, %c0_9], %2 {strides = array<i32>} : memref<16x128xf32, #tpu.memory_space<vmem>>, vector<16x128xf32>,
    } else {
    }
    %c0_i32_4 = arith.constant 0 : i32
    %6 = arith.cmpi sgt, %arg2, %c0_i32_4 : i32
    %7 = arith.extui %6 : i1 to i32
    %c0_i32_5 = arith.constant 0 : i32
    %8 = arith.cmpi ne, %7, %c0_i32_5 : i32
    scf.if %8 {
      %c0_8 = arith.constant 0 : index
      %c0_9 = arith.constant 0 : index
      %12 = vector.load %arg6[%c0_8, %c0_9] : memref<16x128xf32, #tpu.memory_space<vmem>>, vector<16x128xf32>
      %13 = arith.addf %12, %2 : vector<16x128xf32>
      %c0_10 = arith.constant 0 : index
      %c0_11 = arith.constant 0 : index
      %14 = vector.load %arg6[%c0_10, %c0_11] : memref<16x128xf32, #tpu.memory_space<vmem>>, vector<16x128xf32>
      tpu.vector_store %arg6[%c0_10, %c0_11], %13 {strides = array<i32>} : memref<16x128xf32, #tpu.memory_space<vmem>>, vector<16x128xf32>,
    } else {
    }
    %c0_i32_6 = arith.constant 0 : i32
    %9 = arith.cmpi eq, %arg2, %c0_i32_6 : i32
    %10 = arith.extui %9 : i1 to i32
    %c0_i32_7 = arith.constant 0 : i32
    %11 = arith.cmpi ne, %10, %c0_i32_7 : i32
    scf.if %11 {
      %c0_8 = arith.constant 0 : index
      %c0_9 = arith.constant 0 : index
      %12 = vector.load %arg6[%c0_8, %c0_9] : memref<16x128xf32, #tpu.memory_space<vmem>>, vector<16x128xf32>
      %c0_10 = arith.constant 0 : index
      %c0_11 = arith.constant 0 : index
      %13 = vector.load %arg5[%c0_10, %c0_11] : memref<1x128xbf16, #tpu.memory_space<vmem>>, vector<1x128xbf16>
      %14 = arith.extf %13 : vector<1x128xbf16> to vector<1x128xf32>
      %15 = vector.broadcast %14 : vector<1x128xf32> to vector<16x128xf32>
      %16 = arith.addf %12, %15 : vector<16x128xf32>
      %17 = arith.truncf %16 : vector<16x128xf32> to vector<16x128xbf16>
      %18 = arith.extf %17 : vector<16x128xbf16> to vector<16x128xf32>
      %c0_12 = arith.constant 0 : index
      %c0_13 = arith.constant 0 : index
      %19 = vector.load %arg6[%c0_12, %c0_13] : memref<16x128xf32, #tpu.memory_space<vmem>>, vector<16x128xf32>
      tpu.vector_store %arg6[%c0_12, %c0_13], %18 {strides = array<i32>} : memref<16x128xf32, #tpu.memory_space<vmem>>, vector<16x128xf32>,
    } else {
    }
    return
  }
  func.func @transform_0(%arg0: i32, %arg1: i32, %arg2: i32) -> (i32, i32) {
    %c0_i32 = arith.constant 0 : i32
    return %arg0, %arg2 : i32, i32
  }
  func.func @transform_1(%arg0: i32, %arg1: i32, %arg2: i32) -> (i32, i32) {
    %c0_i32 = arith.constant 0 : i32
    return %arg2, %arg1 : i32, i32
  }
  func.func @transform_2(%arg0: i32, %arg1: i32, %arg2: i32) -> (i32, i32) {
    %c0_i32 = arith.constant 0 : i32
    %c0_i32_0 = arith.constant 0 : i32
    return %c0_i32, %arg1 : i32, i32
  }
  func.func @transform_3(%arg0: i32, %arg1: i32, %arg2: i32) -> (i32, i32) {
    %c0_i32 = arith.constant 0 : i32
    return %arg0, %arg1 : i32, i32
  }
}

</mosaic_0001>

<llo_original>
// kernel: tpu_custom_call.1
$region0: #{tpu_custom_call.1}
  #allocation0 [shape = 'u32[]', space=smem, size = 0x4, offset = 0x4, fixed_abs, tag = 'smem constant byte address 0x4 - core index']
  #allocation1 [shape = 'u32[144,128]{1,0:T(1,128)}', space=vmem, size = 0x12000, scoped, tag = 'internal scratch']
  %s0 = inlined_call_operand.hbm [shape: bf16[16,128], index: 0, kind: input, shape index: {}]
  %s1 = inlined_call_operand.hbm [shape: bf16[128,128], index: 1, kind: input, shape index: {}]
  %s2 = inlined_call_operand.vmem [shape: bf16[1,128], index: 2, kind: input, shape index: {}]
  %s3 = inlined_call_operand.hbm [shape: f32[16,128], index: 3, kind: output, shape index: {}]
  %s4 = sld [smem:[#allocation0]]
  $region42: #{tpu_custom_call.1} parent=0
    _
  %s6 = ssub.s32 1, %s4
  %s7 = scalar_select 0, %s6, %s4
  $region1: #{tpu_custom_call.1} parent=0
    #allocation2 [shape = 'u8[4096]{0}', space=vmem, size = 0x1000, scoped, tag = 'input window, operand 0, single buffered']
    #allocation3 [shape = 's32[1]{0}', space=sflag, size = 0x4, scoped, tag = 'scoped memory for tpu_custom_call.1']
    #allocation4 [shape = 's32[1]{0}', space=sflag, size = 0x4, scoped, tag = 'scoped memory for tpu_custom_call.1']
    #allocation5 [shape = 'u8[32768]{0}', space=vmem, size = 0x8000, scoped, tag = 'input window, operand 1, single buffered']
    #allocation6 [shape = 's32[1]{0}', space=sflag, size = 0x4, scoped, tag = 'scoped memory for tpu_custom_call.1']
    #allocation7 [shape = 'u8[8192]{0}', space=vmem, size = 0x2000, scoped, tag = 'output window, operand 0, single buffered']
    %8 = vsyncpa [#allocation3], 0
    %9 = vsyncpa [#allocation6], 0
    %10 = vsyncpa [#allocation4], 0
    // Predicated region
    $region2: #{tpu_custom_call.1} parent=1 // pred_check
      _
    $region3: #{tpu_custom_call.1} parent=1 // pred_check_branch
      %12 = sbr.rel (0) target = $region5
    $region4: #{tpu_custom_call.1} parent=1 // pred_region
      %s14 = ssub.s32 128, 128
      %15 = vsyncadd [#allocation3], %s14
      %s16 = sshll.u32 [#allocation2], 4
      %s17 = int_to_ptr.vmem [resolvable:$true] %s16
      %22 = dma.hbm_to_vmem [thread:$0]  %s0, 128, %s17, [#allocation3], 64, 64, 4
    $region5: #{tpu_custom_call.1} parent=1 // pred_fallthru
      _
    // Predicated region
    $region6: #{tpu_custom_call.1} parent=1 // pred_check
      _
    $region7: #{tpu_custom_call.1} parent=1 // pred_check_branch
      %24 = sbr.rel (0) target = $region9
    $region8: #{tpu_custom_call.1} parent=1 // pred_region
      %s26 = ssub.s32 1024, 1024
      %27 = vsyncadd [#allocation6], %s26
      %s28 = sshll.u32 [#allocation5], 4
      %s29 = int_to_ptr.vmem [resolvable:$true] %s28
      %34 = dma.hbm_to_vmem [thread:$0]  %s1, 1024, %s29, [#allocation6], 64, 64, 4
    $region9: #{tpu_custom_call.1} parent=1 // pred_fallthru
      _
    // Predicated region
    $region10: #{tpu_custom_call.1} parent=1 // pred_check
      _
    $region11: #{tpu_custom_call.1} parent=1 // pred_check_branch
      %36 = sbr.rel (0) target = $region13
    $region12: #{tpu_custom_call.1} parent=1 // pred_region
      _
    $region13: #{tpu_custom_call.1} parent=1 // pred_fallthru
      _
    // Predicated region
    $region14: #{tpu_custom_call.1} parent=1 // pred_check
      _
    $region15: #{tpu_custom_call.1} parent=1 // pred_check_branch
      %38 = sbr.rel (0) target = $region17
    $region16: #{tpu_custom_call.1} parent=1 // pred_region
      %39 = dma.done [#allocation3], 128
    $region17: #{tpu_custom_call.1} parent=1 // pred_fallthru
      _
    // Predicated region
    $region18: #{tpu_custom_call.1} parent=1 // pred_check
      _
    $region19: #{tpu_custom_call.1} parent=1 // pred_check_branch
      %41 = sbr.rel (0) target = $region21
    $region20: #{tpu_custom_call.1} parent=1 // pred_region
      %42 = dma.done [#allocation6], 1024
    $region21: #{tpu_custom_call.1} parent=1 // pred_fallthru
      _
    %v44 = vld [vmem:[#allocation2] sm:$0xf]
    %v45 = vld [vmem:[#allocation2 + $0x4] sm:$0xf]
    %v46 = vld [vmem:[#allocation5] sm:$0xf]
    %v47 = vld [vmem:[#allocation5 + $0x4] sm:$0xf]
    %v48 = vld [vmem:[#allocation5 + $0x8] sm:$0xf]
    %v49 = vld [vmem:[#allocation5 + $0xc] sm:$0xf]
    %v50 = vld [vmem:[#allocation5 + $0x10] sm:$0xf]
    %v51 = vld [vmem:[#allocation5 + $0x14] sm:$0xf]
    %v52 = vld [vmem:[#allocation5 + $0x18] sm:$0xf]
    %v53 = vld [vmem:[#allocation5 + $0x1c] sm:$0xf]
    %v54 = vld [vmem:[#allocation5 + $0x20] sm:$0xf]
    %v55 = vld [vmem:[#allocation5 + $0x24] sm:$0xf]
    %v56 = vld [vmem:[#allocation5 + $0x28] sm:$0xf]
    %v57 = vld [vmem:[#allocation5 + $0x2c] sm:$0xf]
    %v58 = vld [vmem:[#allocation5 + $0x30] sm:$0xf]
    %v59 = vld [vmem:[#allocation5 + $0x34] sm:$0xf]
    %v60 = vld [vmem:[#allocation5 + $0x38] sm:$0xf]
    %v61 = vld [vmem:[#allocation5 + $0x3c] sm:$0xf]
    %v64 = vunpack.c.l.b16 %v44
    %v65 = vunpack.c.l.b16 %v45
    %v66 = vpack.c.b16 %v65, %v64
    %v84 = vunpack.c.l.b16 %v46
    %v85 = vunpack.c.l.b16 %v47
    %v86 = vunpack.c.l.b16 %v48
    %v87 = vunpack.c.l.b16 %v49
    %v88 = vunpack.c.l.b16 %v50
    %v89 = vunpack.c.l.b16 %v51
    %v90 = vunpack.c.l.b16 %v52
    %v91 = vunpack.c.l.b16 %v53
    %v92 = vunpack.c.l.b16 %v54
    %v93 = vunpack.c.l.b16 %v55
    %v94 = vunpack.c.l.b16 %v56
    %v95 = vunpack.c.l.b16 %v57
    %v96 = vunpack.c.l.b16 %v58
    %v97 = vunpack.c.l.b16 %v59
    %v98 = vunpack.c.l.b16 %v60
    %v99 = vunpack.c.l.b16 %v61
    %v100 = vpack.c.b16 %v85, %v84
    %v101 = vpack.c.b16 %v87, %v86
    %v102 = vpack.c.b16 %v89, %v88
    %v103 = vpack.c.b16 %v91, %v90
    %v104 = vpack.c.b16 %v93, %v92
    %v105 = vpack.c.b16 %v95, %v94
    %v106 = vpack.c.b16 %v97, %v96
    %v107 = vpack.c.b16 %v99, %v98
    %116 = vmatprep.subr.bf16.mxu0 0
    %117 = vmatpush1.bf16.msra.mxu0 %v100
    %118 = vmatprep.subr.bf16.mxu0 0
    %119 = vmatpush1.bf16.msra.mxu0 %v101
    %120 = vmatprep.subr.bf16.mxu0 0
    %121 = vmatpush1.bf16.msra.mxu0 %v102
    %122 = vmatprep.subr.bf16.mxu0 0
    %123 = vmatpush1.bf16.msra.mxu0 %v103
    %124 = vmatprep.subr.bf16.mxu0 0
    %125 = vmatpush1.bf16.msra.mxu0 %v104
    %126 = vmatprep.subr.bf16.mxu0 0
    %127 = vmatpush1.bf16.msra.mxu0 %v105
    %128 = vmatprep.subr.bf16.mxu0 0
    %129 = vmatpush1.bf16.msra.mxu0 %v106
    %130 = vmatprep.subr.bf16.mxu0 0
    %131 = vmatpush1.bf16.msra.mxu0 %v107
    %132 = vmatprep.subr.bf16.mxu0 0
    %133 = vmatpush1.bf16.msra.mxu0 0
    %134 = vmatprep.subr.bf16.mxu0 0
    %135 = vmatpush1.bf16.msra.mxu0 0
    %136 = vmatprep.subr.bf16.mxu0 0
    %137 = vmatpush1.bf16.msra.mxu0 0
    %138 = vmatprep.subr.bf16.mxu0 0
    %139 = vmatpush1.bf16.msra.mxu0 0
    %140 = vmatprep.subr.bf16.mxu0 0
    %141 = vmatpush1.bf16.msra.mxu0 0
    %142 = vmatprep.subr.bf16.mxu0 0
    %143 = vmatpush1.bf16.msra.mxu0 0
    %144 = vmatprep.subr.bf16.mxu0 0
    %145 = vmatpush1.bf16.msra.mxu0 0
    %146 = vmatprep.subr.bf16.mxu0 0
    %147 = vmatpush1.bf16.msra.mxu0 0
    %148 = vmatprep.mubr.bf16.mxu0 0
    %149 = vmatmul.mubr.bf16.gmra.mrb[0].mxu0 %v66
    %v150 = vpop.f32.mrb[0].mxu0
    %v151 = vadd.f32 0.0, %v150
    %v152 = vpop.f32.mrb[0].mxu0
    %v153 = vpop.f32.mrb[0].mxu0
    %v154 = vadd.f32 0.0, %v153
    %v155 = vpop.f32.mrb[0].mxu0
    %156 = vdwg.mxu0
    %p157 = scmp.eq.s32.totalorder 0, 0
    // Predicated region
    $region22: #{tpu_custom_call.1} parent=1 // pred_check
      %p158 = pneg %p157
    $region23: #{tpu_custom_call.1} parent=1 // pred_check_branch
      %160 = sbr.rel (%p158) target = $region25
    $region24: #{tpu_custom_call.1} parent=1 // pred_region
      %161 = vst [vmem:[#allocation7] sm:$0xff] %v151
      %162 = vst [vmem:[#allocation7 + $0x8] sm:$0xff] %v154
    $region25: #{tpu_custom_call.1} parent=1 // pred_fallthru
      _
    %p163 = scmp.gt.s32.totalorder 0, 0
    // Predicated region
    $region26: #{tpu_custom_call.1} parent=1 // pred_check
      %p164 = pneg %p163
    $region27: #{tpu_custom_call.1} parent=1 // pred_check_branch
      %166 = sbr.rel (%p164) target = $region29
    $region28: #{tpu_custom_call.1} parent=1 // pred_region
      %v167 = vld [vmem:[#allocation7] sm:$0xff]
      %v168 = vld [vmem:[#allocation7 + $0x8] sm:$0xff]
      %v169 = vadd.f32 %v167, %v151
      %v170 = vadd.f32 %v168, %v154
      %171 = vst [vmem:[#allocation7] sm:$0xff] %v169
      %172 = vst [vmem:[#allocation7 + $0x8] sm:$0xff] %v170
    $region29: #{tpu_custom_call.1} parent=1 // pred_fallthru
      _
    // Predicated region
    $region30: #{tpu_custom_call.1} parent=1 // pred_check
      %p173 = pneg %p157
    $region31: #{tpu_custom_call.1} parent=1 // pred_check_branch
      %175 = sbr.rel (%p173) target = $region33
    $region32: #{tpu_custom_call.1} parent=1 // pred_region
      %v176 = vld [vmem:[#allocation7] sm:$0xff]
      %v177 = vld [vmem:[#allocation7 + $0x8] sm:$0xff]
      %v178 = vld [vmem:[%s2] sm:$0x1]
      %v179 = vunpack.c.l.bf16 %v178
      %v180 = vlaneseq
      %v181 = vshrl.u32 %v180, 7
      %v182 = vsub.s32 0, %v181
      %v183 = vrot.slane %v179, %v182
      %v184 = vadd.f32 %v176, %v183
      %v185 = vadd.f32 %v177, %v183
      %v186 = vpack.c.bf16 %v185, %v184
      %v187 = vunpack.c.l.bf16 %v186
      %v188 = vunpack.c.h.bf16 %v186
      %189 = vst [vmem:[#allocation7] sm:$0xff] %v187
      %190 = vst [vmem:[#allocation7 + $0x8] sm:$0xff] %v188
    $region33: #{tpu_custom_call.1} parent=1 // pred_fallthru
      _
    // Predicated region
    $region34: #{tpu_custom_call.1} parent=1 // pred_check
      _
    $region35: #{tpu_custom_call.1} parent=1 // pred_check_branch
      %192 = sbr.rel (0) target = $region37
    $region36: #{tpu_custom_call.1} parent=1 // pred_region
      %s194 = ssub.s32 256, 256
      %195 = vsyncadd [#allocation4], %s194
      %s196 = sshll.u32 [#allocation7], 4
      %s197 = int_to_ptr.vmem [resolvable:$true] %s196
      %202 = dma.vmem_to_hbm [thread:$0]  %s197, 256, %s3, [#allocation4], 128, 128, 8
    $region37: #{tpu_custom_call.1} parent=1 // pred_fallthru
      _
    // Predicated region
    $region38: #{tpu_custom_call.1} parent=1 // pred_check
      _
    $region39: #{tpu_custom_call.1} parent=1 // pred_check_branch
      %204 = sbr.rel (0) target = $region41
    $region40: #{tpu_custom_call.1} parent=1 // pred_region
      %205 = dma.done [#allocation4], 256
    $region41: #{tpu_custom_call.1} parent=1 // pred_fallthru
      _
    %206 = vsyncpa [#allocation3], 1
    %207 = vsyncpa [#allocation6], 1
    %208 = vsyncpa [#allocation4], 1

</llo_original>
